<compile_context>
chip_gen: v6e
topology: v6e:2x2x1
jax: 0.10.0
libtpu: 0.0.40
codegen_flags: <defaults>
</compile_context>

<pallas_src>
import jax
import jax.numpy as jnp
from jax.experimental import pallas as pl
from jax.experimental.pallas import tpu as pltpu

VP = 6.0
VS = 6.0 / 1.73
REG = 0.1
MAX_TILE_N = 8192          # lane tile upper bound (multiple of 128); sweepable
ONE_HOT_TABLE_LIMIT = 512  # e_pad + s_pad above this -> wrapper-side gather path


def _round_up(x, m):
    return pl.cdiv(x, m) * m


def _choose_tile(n):
    """Lane tile (multiple of 128) and padded problem size.

    Caps the tile at ~half the padded problem so the 'parallel' grid axis has
    at least 2 steps when possible (lets v7x shard across its 2 TensorCores).
    """
    n128 = _round_up(n, 128)
    half = _round_up(pl.cdiv(n128, 2), 128)
    tile_n = max(128, min(MAX_TILE_N, half))
    n_pad = _round_up(n128, tile_n)
    return tile_n, n_pad


# ---------------------------------------------------------------------------
# Path A: tiny tables, gather done in-kernel (one-hot @ MXU on VMEM tables).
# ---------------------------------------------------------------------------
def _travel_time_kernel(idx_ref, ev_tab_ref, st_tab_ref, out_ref):
    # idx_ref:    (3, TN) int32; rows = [event_index, station_index, phase_type]
    # ev_tab_ref: (8, E_pad) f32; rows = [x, y, z, t0, 0, 0, 0, 0]
    # st_tab_ref: (8, S_pad) f32; rows = [x, y, z, dtP, dtS, 0, 0, 0]
    # out_ref:    (1, TN) f32 predicted arrival time.
    tn = out_ref.shape[1]
    e_pad = ev_tab_ref.shape[1]
    s_pad = st_tab_ref.shape[1]

    ev_idx = idx_ref[0:1, :]
    st_idx = idx_ref[1:2, :]
    ptype = idx_ref[2:3, :]

    # In-kernel embedding gather as one_hot(idx) @ table on the MXU (exact
    # for 0/1 weights; tables are tiny and fully VMEM-resident).
    ev_onehot = (jax.lax.broadcasted_iota(jnp.int32, (e_pad, tn), 0)
                 == ev_idx).astype(jnp.float32)                     # (E_pad, TN)
    ev_feat = jnp.dot(ev_tab_ref[...], ev_onehot,
                      preferred_element_type=jnp.float32)           # (8, TN)

    st_onehot = (jax.lax.broadcasted_iota(jnp.int32, (s_pad, tn), 0)
                 == st_idx).astype(jnp.float32)                     # (S_pad, TN)
    st_feat = jnp.dot(st_tab_ref[...], st_onehot,
                      preferred_element_type=jnp.float32)           # (8, TN)

    # Distance via explicit row slices (keeps it on the VPU, no XLU reduce).
    d0 = ev_feat[0:1, :] - st_feat[0:1, :]
    d1 = ev_feat[1:2, :] - st_feat[1:2, :]
    d2 = ev_feat[2:3, :] - st_feat[2:3, :]
    dist = jnp.sqrt(d0 * d0 + d1 * d1 + d2 * d2)                    # (1, TN)

    is_p = ptype == 0
    inv_v = jnp.where(is_p, jnp.float32(1.0 / VP), jnp.float32(1.0 / VS))
    dt = jnp.where(is_p, st_feat[3:4, :], st_feat[4:5, :])
    out_ref[...] = ev_feat[3:4, :] + dist * inv_v + dt


# ---------------------------------------------------------------------------
# Path B: large tables, gather done in the wrapper (XLA), kernel is pure math.
# ---------------------------------------------------------------------------
def _travel_time_feat_kernel(feat_ref, out_ref):
    # feat_ref: (6, TN) f32; rows = [dx, dy, dz, t0, dt_selected, 1/v]
    d0 = feat_ref[0:1, :]
    d1 = feat_ref[1:2, :]
    d2 = feat_ref[2:3, :]
    dist = jnp.sqrt(d0 * d0 + d1 * d1 + d2 * d2)
    out_ref[...] = feat_ref[3:4, :] + dist * feat_ref[5:6, :] + feat_ref[4:5, :]


def travel_time_pred(event_loc_w, event_time_w, station_loc_w, station_dt_w,
                     station_index, event_index, phase_type,
                     use_onehot_gather=None):
    n = int(phase_type.shape[0])
    tile_n, n_pad = _choose_tile(n)

    num_event = event_loc_w.shape[0]
    num_station = station_loc_w.shape[0]
    e_pad = max(8, _round_up(num_event, 8))
    s_pad = max(8, _round_up(num_station, 8))

    if use_onehot_gather is None:
        # One-hot gather is O((E+S) * N); only worth it while tables are tiny.
        use_onehot_gather = (e_pad + s_pad) <= ONE_HOT_TABLE_LIMIT

    if use_onehot_gather:
        # Single int32 index slab -> one small DMA per grid step.
        idx = jnp.stack([event_index.astype(jnp.int32),
                         station_index.astype(jnp.int32),
                         phase_type.astype(jnp.int32)], axis=0)        # (3, N)
        idx = jnp.pad(idx, ((0, 0), (0, n_pad - n)))                   # (3, n_pad)

        # Tiny feature-major tables, padded only to 8 sublanes x round8 lanes.
        ev_tab = jnp.concatenate([event_loc_w, event_time_w],
                                 axis=1).T.astype(jnp.float32)          # (4, E)
        ev_tab = jnp.pad(ev_tab, ((0, 4), (0, e_pad - num_event)))      # (8, E_pad)
        st_tab = jnp.concatenate([station_loc_w, station_dt_w],
                                 axis=1).T.astype(jnp.float32)          # (5, S)
        st_tab = jnp.pad(st_tab, ((0, 3), (0, s_pad - num_station)))    # (8, S_pad)

        pred = pl.pallas_call(
            _travel_time_kernel,
            out_shape=jax.ShapeDtypeStruct((1, n_pad), jnp.float32),
            grid=(n_pad // tile_n,),
            in_specs=[
                pl.BlockSpec((3, tile_n), lambda i: (0, i)),
                pl.BlockSpec((8, e_pad), lambda i: (0, 0)),
                pl.BlockSpec((8, s_pad), lambda i: (0, 0)),
            ],
            out_specs=pl.BlockSpec((1, tile_n), lambda i: (0, i)),
            compiler_params=pltpu.CompilerParams(
                dimension_semantics=("parallel",)),
        )(idx, ev_tab, st_tab)
    else:
        # Large-catalog fallback: XLA gather of the per-phase features in the
        # wrapper, kernel only does the arithmetic.
        ev_loc = jnp.take(event_loc_w, event_index, axis=0)             # (N, 3)
        st_loc = jnp.take(station_loc_w, station_index, axis=0)         # (N, 3)
        t0 = jnp.take(event_time_w, event_index, axis=0)[:, 0]          # (N,)
        dt = jnp.take_along_axis(jnp.take(station_dt_w, station_index, axis=0),
                                 phase_type[:, None], axis=1)[:, 0]     # (N,)
        inv_v = jnp.where(phase_type == 0, 1.0 / VP, 1.0 / VS)
        diff = (ev_loc - st_loc).T                                       # (3, N)
        feat = jnp.concatenate(
            [diff.astype(jnp.float32),
             t0[None].astype(jnp.float32),
             dt[None].astype(jnp.float32),
             inv_v[None].astype(jnp.float32)], axis=0)                   # (6, N)
        feat = jnp.pad(feat, ((0, 0), (0, n_pad - n)))                   # (6, n_pad)

        pred = pl.pallas_call(
            _travel_time_feat_kernel,
            out_shape=jax.ShapeDtypeStruct((1, n_pad), jnp.float32),
            grid=(n_pad // tile_n,),
            in_specs=[pl.BlockSpec((6, tile_n), lambda i: (0, i))],
            out_specs=pl.BlockSpec((1, tile_n), lambda i: (0, i)),
            compiler_params=pltpu.CompilerParams(
                dimension_semantics=("parallel",)),
        )(feat)

    return pred[0, :n][:, None]      # (N, 1) float32, matches torch output


def _huber(x, y, delta=1.0):
    d = x - y
    ad = jnp.abs(d)
    return jnp.where(ad < delta, 0.5 * d * d, delta * (ad - 0.5 * delta))


def travel_time_forward(params, station_index, event_index, phase_type,
                        phase_time=None, phase_weight=None):
    event_loc_w, event_time_w, station_loc_w, station_dt_w = params
    pred = travel_time_pred(event_loc_w, event_time_w, station_loc_w,
                            station_dt_w, station_index, event_index,
                            phase_type)
    loss = jnp.float32(0.0)
    if phase_time is not None:
        # Loss terms are small masked reductions -> plain JAX glue.
        ev_time = jnp.take(event_time_w, event_index, axis=0)        # (N, 1)
        st_dt_sel = jnp.take(station_dt_w, station_index, axis=0)    # (N, 2)
        h = _huber(pred - ev_time, phase_time - ev_time)             # (N, 1)
        for t in (0, 1):
            mask = (phase_type == t).astype(jnp.float32)[:, None]    # (N, 1)
            cnt = jnp.maximum(jnp.sum(mask), 1.0)
            mean_h = jnp.sum(h * mask) / cnt
            if phase_weight is not None:
                # torch broadcasts (n,1)*(n,) -> (n,n); its mean equals
                # mean(huber) * mean(weight) over the selected subset.
                mean_w = jnp.sum(phase_weight[:, None] * mask) / cnt
                loss = loss + mean_h * mean_w
            else:
                loss = loss + mean_h
            dt_t = st_dt_sel[:, t:t + 1]
            loss = loss + REG * jnp.sum(jnp.abs(dt_t) * mask) / cnt
    return {"phase_time": pred, "loss": loss}


def _reference_pred(event_loc_w, event_time_w, station_loc_w, station_dt_w,
                    station_index, event_index, phase_type):
    ev_loc = event_loc_w[event_index]
    st_loc = station_loc_w[station_index]
    ev_time = event_time_w[event_index]
    dist = jnp.linalg.norm(ev_loc - st_loc, axis=-1, keepdims=True)
    vel = jnp.where(phase_type[:, None] == 0, VP, VS)
    dt = jnp.take_along_axis(station_dt_w[station_index],
                             phase_type[:, None], axis=1)
    return ev_time + dist / vel + dt


if __name__ == "__main__":
    key = jax.random.PRNGKey(0)
    k1, k2, k3, k4, k5, k6 = jax.random.split(key, 6)

    num_event = 16
    num_station = 8
    num_phase = 200

    # Deterministic synthetic parameters (shapes from TravelTime.__init__).
    event_loc_w = jax.random.normal(k1, (num_event, 3), jnp.float32) * 10.0
    event_time_w = jax.random.uniform(k2, (num_event, 1), jnp.float32) * 5.0
    station_loc_w = jax.random.uniform(k3, (num_station, 3), jnp.float32) * 50.0
    station_dt_w = jnp.zeros((num_station, 2), jnp.float32)  # default init
    params = (event_loc_w, event_time_w, station_loc_w, station_dt_w)

    station_index = jax.random.randint(k4, (num_phase,), 0, num_station,
                                       dtype=jnp.int32)
    event_index = jax.random.randint(k5, (num_phase,), 0, num_event,
                                     dtype=jnp.int32)
    phase_type = jax.random.randint(k6, (num_phase,), 0, 2, dtype=jnp.int32)
    phase_weight = jax.random.uniform(jax.random.PRNGKey(7), (num_phase,),
                                      jnp.float32)

    out = travel_time_forward(params, station_index, event_index, phase_type,
                              phase_weight=phase_weight)
    pred = jax.block_until_ready(out["phase_time"])

    ref = _reference_pred(event_loc_w, event_time_w, station_loc_w,
                          station_dt_w, station_index, event_index, phase_type)
    assert pred.shape == (num_phase, 1) and pred.dtype == jnp.float32
    assert jnp.allclose(pred, ref, rtol=1e-5, atol=1e-5)

    # Also exercise the large-catalog fallback kernel (wrapper-side gather).
    pred_fb = travel_time_pred(event_loc_w, event_time_w, station_loc_w,
                               station_dt_w, station_index, event_index,
                               phase_type, use_onehot_gather=False)
    pred_fb = jax.block_until_ready(pred_fb)
    assert jnp.allclose(pred_fb, ref, rtol=1e-5, atol=1e-5)

    print("KERNEL_OK")
</pallas_src>

<mosaic_0001>
module attributes {stable_mosaic.version = 11 : i64} {
  func.func @_travel_time_kernel(%arg0: i32, %arg1: memref<3x128xi32, #tpu.memory_space<vmem>>, %arg2: memref<8x16xf32, #tpu.memory_space<vmem>>, %arg3: memref<8x8xf32, #tpu.memory_space<vmem>>, %arg4: memref<1x128xf32, #tpu.memory_space<vmem>>) attributes {dimension_semantics = [#tpu.dimension_semantics<parallel>], iteration_bounds = array<i64: 2>, scalar_prefetch = 0 : i64, scratch_operands = 0 : i64, tpu.core_type = #tpu.core_type<tc>, window_params = [{transform_indices = @transform_0, window_bounds = array<i64: 3, 128>}, {pipeline_mode = #tpu.pipeline_mode<synchronous>, transform_indices = @transform_1, window_bounds = array<i64: 8, 16>}, {pipeline_mode = #tpu.pipeline_mode<synchronous>, transform_indices = @transform_2, window_bounds = array<i64: 8, 8>}, {transform_indices = @transform_3, window_bounds = array<i64: 1, 128>}]} {
    %c0 = arith.constant 0 : index
    %c0_0 = arith.constant 0 : index
    %0 = vector.load %arg1[%c0, %c0_0] : memref<3x128xi32, #tpu.memory_space<vmem>>, vector<1x128xi32>
    %c1 = arith.constant 1 : index
    %c0_1 = arith.constant 0 : index
    %1 = vector.load %arg1[%c1, %c0_1] : memref<3x128xi32, #tpu.memory_space<vmem>>, vector<1x128xi32>
    %c2 = arith.constant 2 : index
    %c0_2 = arith.constant 0 : index
    %2 = vector.load %arg1[%c2, %c0_2] : memref<3x128xi32, #tpu.memory_space<vmem>>, vector<1x128xi32>
    %3 = tpu.iota {dimensions = array<i32: 0>} : vector<16x128xi32>
    %4 = vector.broadcast %0 : vector<1x128xi32> to vector<16x128xi32>
    %5 = arith.cmpi eq, %3, %4 : vector<16x128xi32>
    %6 = arith.extui %5 : vector<16x128xi1> to vector<16x128xi32>
    %7 = arith.sitofp %6 : vector<16x128xi32> to vector<16x128xf32>
    %c0_3 = arith.constant 0 : index
    %c0_4 = arith.constant 0 : index
    %8 = vector.load %arg2[%c0_3, %c0_4] : memref<8x16xf32, #tpu.memory_space<vmem>>, vector<8x16xf32>
    %cst = arith.constant dense<0.000000e+00> : vector<8x128xf32>
    %9 = tpu.matmul %8, %7, %cst {dimension_numbers = #tpu.dot_dimension_numbers<[1], [0], [0], [1], [0, 0, 1, 1], [], []>} : vector<8x16xf32>, vector<16x128xf32>, vector<8x128xf32> -> vector<8x128xf32>
    %10 = tpu.iota {dimensions = array<i32: 0>} : vector<8x128xi32>
    %11 = vector.broadcast %1 : vector<1x128xi32> to vector<8x128xi32>
    %12 = arith.cmpi eq, %10, %11 : vector<8x128xi32>
    %13 = arith.extui %12 : vector<8x128xi1> to vector<8x128xi32>
    %14 = arith.sitofp %13 : vector<8x128xi32> to vector<8x128xf32>
    %c0_5 = arith.constant 0 : index
    %c0_6 = arith.constant 0 : index
    %15 = vector.load %arg3[%c0_5, %c0_6] : memref<8x8xf32, #tpu.memory_space<vmem>>, vector<8x8xf32>
    %cst_7 = arith.constant dense<0.000000e+00> : vector<8x128xf32>
    %16 = tpu.matmul %15, %14, %cst_7 {dimension_numbers = #tpu.dot_dimension_numbers<[1], [0], [0], [1], [0, 0, 1, 1], [], []>} : vector<8x8xf32>, vector<8x128xf32>, vector<8x128xf32> -> vector<8x128xf32>
    %17 = vector.extract_strided_slice %9 {offsets = [0, 0], sizes = [1, 128], strides = [1, 1]} : vector<8x128xf32> to vector<1x128xf32>
    %18 = vector.extract_strided_slice %16 {offsets = [0, 0], sizes = [1, 128], strides = [1, 1]} : vector<8x128xf32> to vector<1x128xf32>
    %19 = arith.subf %17, %18 : vector<1x128xf32>
    %20 = vector.extract_strided_slice %9 {offsets = [1, 0], sizes = [1, 128], strides = [1, 1]} : vector<8x128xf32> to vector<1x128xf32>
    %21 = vector.extract_strided_slice %16 {offsets = [1, 0], sizes = [1, 128], strides = [1, 1]} : vector<8x128xf32> to vector<1x128xf32>
    %22 = arith.subf %20, %21 : vector<1x128xf32>
    %23 = vector.extract_strided_slice %9 {offsets = [2, 0], sizes = [1, 128], strides = [1, 1]} : vector<8x128xf32> to vector<1x128xf32>
    %24 = vector.extract_strided_slice %16 {offsets = [2, 0], sizes = [1, 128], strides = [1, 1]} : vector<8x128xf32> to vector<1x128xf32>
    %25 = arith.subf %23, %24 : vector<1x128xf32>
    %26 = arith.mulf %19, %19 : vector<1x128xf32>
    %27 = arith.mulf %22, %22 : vector<1x128xf32>
    %28 = arith.addf %26, %27 : vector<1x128xf32>
    %29 = arith.mulf %25, %25 : vector<1x128xf32>
    %30 = arith.addf %28, %29 : vector<1x128xf32>
    %31 = math.sqrt %30 : vector<1x128xf32>
    %c0_i32 = arith.constant 0 : i32
    %32 = vector.broadcast %c0_i32 : i32 to vector<1x128xi32>
    %33 = arith.cmpi eq, %2, %32 : vector<1x128xi32>
    %cst_8 = arith.constant 0.166666672 : f32
    %cst_9 = arith.constant 0.288333327 : f32
    %34 = vector.broadcast %cst_8 : f32 to vector<1x128xf32>
    %35 = vector.broadcast %cst_9 : f32 to vector<1x128xf32>
    %36 = arith.select %33, %34, %35 : vector<1x128xi1>, vector<1x128xf32>
    %37 = vector.extract_strided_slice %16 {offsets = [3, 0], sizes = [1, 128], strides = [1, 1]} : vector<8x128xf32> to vector<1x128xf32>
    %38 = vector.extract_strided_slice %16 {offsets = [4, 0], sizes = [1, 128], strides = [1, 1]} : vector<8x128xf32> to vector<1x128xf32>
    %39 = arith.select %33, %37, %38 : vector<1x128xi1>, vector<1x128xf32>
    %40 = vector.extract_strided_slice %9 {offsets = [3, 0], sizes = [1, 128], strides = [1, 1]} : vector<8x128xf32> to vector<1x128xf32>
    %41 = arith.mulf %31, %36 : vector<1x128xf32>
    %42 = arith.addf %40, %41 : vector<1x128xf32>
    %43 = arith.addf %42, %39 : vector<1x128xf32>
    %c0_10 = arith.constant 0 : index
    %c0_11 = arith.constant 0 : index
    %44 = vector.load %arg4[%c0_10, %c0_11] : memref<1x128xf32, #tpu.memory_space<vmem>>, vector<1x128xf32>
    tpu.vector_store %arg4[%c0_10, %c0_11], %43 {strides = array<i32>} : memref<1x128xf32, #tpu.memory_space<vmem>>, vector<1x128xf32>,
    return
  }
  func.func @transform_0(%arg0: i32) -> (i32, i32) {
    %c0_i32 = arith.constant 0 : i32
    %c0_i32_0 = arith.constant 0 : i32
    return %c0_i32, %arg0 : i32, i32
  }
  func.func @transform_1(%arg0: i32) -> (i32, i32) {
    %c0_i32 = arith.constant 0 : i32
    %c0_i32_0 = arith.constant 0 : i32
    %c0_i32_1 = arith.constant 0 : i32
    return %c0_i32, %c0_i32_0 : i32, i32
  }
  func.func @transform_2(%arg0: i32) -> (i32, i32) {
    %c0_i32 = arith.constant 0 : i32
    %c0_i32_0 = arith.constant 0 : i32
    %c0_i32_1 = arith.constant 0 : i32
    return %c0_i32, %c0_i32_0 : i32, i32
  }
  func.func @transform_3(%arg0: i32) -> (i32, i32) {
    %c0_i32 = arith.constant 0 : i32
    %c0_i32_0 = arith.constant 0 : i32
    return %c0_i32, %arg0 : i32, i32
  }
}

</mosaic_0001>

<llo_original>
// kernel: tpu_custom_call.1
$region0: #{tpu_custom_call.1}
  #allocation0 [shape = 'u32[]', space=smem, size = 0x4, offset = 0x4, fixed_abs, tag = 'smem constant byte address 0x4 - core index']
  #allocation1 [shape = 'u32[144,128]{1,0:T(1,128)}', space=vmem, size = 0x12000, scoped, tag = 'internal scratch']
  %s0 = inlined_call_operand.hbm [shape: s32[3,256], index: 0, kind: input, shape index: {}]
  %s1 = inlined_call_operand.hbm [shape: f32[8,16], index: 1, kind: input, shape index: {}]
  %s2 = inlined_call_operand.hbm [shape: f32[8,8], index: 2, kind: input, shape index: {}]
  %s3 = inlined_call_operand.hbm [shape: f32[1,256], index: 3, kind: output, shape index: {}]
  %s4 = sld [smem:[#allocation0]]
  $region57: #{tpu_custom_call.1} parent=0
    _
  %s6 = ssub.s32 1, %s4
  %s7 = scalar_select 0, %s6, %s4
  $region1: #{tpu_custom_call.1} parent=0
    #allocation2 [shape = 'u8[4096]{0}', space=vmem, size = 0x1000, scoped, tag = 'input window, operand 0']
    #allocation3 [shape = 's32[2]{0}', space=sflag, size = 0x8, scoped, tag = 'scoped memory for tpu_custom_call.1']
    #allocation4 [shape = 's32[2]{0}', space=sflag, size = 0x8, scoped, tag = 'scoped memory for tpu_custom_call.1']
    #allocation5 [shape = 'u8[4096]{0}', space=vmem, size = 0x1000, scoped, tag = 'input window, operand 1, single buffered']
    #allocation6 [shape = 's32[1]{0}', space=sflag, size = 0x4, scoped, tag = 'scoped memory for tpu_custom_call.1']
    #allocation7 [shape = 'u8[4096]{0}', space=vmem, size = 0x1000, scoped, tag = 'input window, operand 2, single buffered']
    #allocation8 [shape = 'u8[1024]{0}', space=vmem, size = 0x400, scoped, tag = 'output window, operand 0']
    %8 = vsyncpa [#allocation3], 0
    %s9 = scalar_lea.sflag [#allocation3], 1
    %10 = vsyncpa %s9, 0
    %11 = vsyncpa [#allocation6], 0
    %12 = vsyncpa [#allocation4], 0
    %s13 = scalar_lea.sflag [#allocation4], 1
    %14 = vsyncpa %s13, 0
    loop: start=0, step=1, limit=4
    $region2: #{tpu_custom_call.1} parent=1 // loop_pre_header
      _
    $region3: #{tpu_custom_call.1} parent=1 // loop_header
      %s16 = sphi 0, %s20
      %p17 = scmp.ge.s32.totalorder %s16, 4
      %s26 = sphi 0, %s28
      %s29 = sphi 0, %s26
      %s30 = sphi 0, %s29
      %s46 = sphi 0, %s30
      %s50 = sphi 0, %s50
      %s52 = sphi 0, %s50
      %s53 = sphi 0, %s52
      %s67 = sphi 0, %s53
      %s71 = sphi 0, %s71
      %s73 = sphi 0, %s71
      %s74 = sphi 0, %s73
      %s88 = sphi 0, %s74
      %s94 = sphi 0, %s96
      %s97 = sphi 0, %s94
      %s98 = sphi 0, %s97
      %s114 = sphi 0, %s98
    $region4: #{tpu_custom_call.1} parent=1 // loop_header_branch
      %19 = sbr.rel (%p17) target = $region8
    $region5: #{tpu_custom_call.1} parent=1 // loop_body
      %s21 = ssub.s32 %s16, 1
      %s22 = ssub.s32 %s16, 2
      %s23 = sadd.s32 %s16, 1
      %s24 = ssub.s32 %s16, %s23
      %p25 = scmp.eq.s32.totalorder %s24, 0
      %s27 = sadd.s32 %s26, 1
      %s28 = scalar_select %p25, %s26, %s27
      %p31 = pneg %p25
      %p32 = scmp.eq.s32.totalorder %s16, 1
      %p33 = por %p31, %p32
      %p34 = scmp.ne.s32.totalorder %s26, %s29
      %p35 = scmp.eq.s32.totalorder %s16, 0
      %p36 = por %p34, %p35
      %p37 = scmp.ne.s32.totalorder %s26, %s29
      %p38 = scmp.eq.s32.totalorder %s21, 1
      %p39 = por %p37, %p38
      %p40 = scmp.ne.s32.totalorder %s29, %s30
      %p41 = scmp.eq.s32.totalorder %s21, 0
      %p42 = por %p40, %p41
      %p43 = scmp.ne.s32.totalorder %s29, %s30
      %p44 = scmp.eq.s32.totalorder %s22, 1
      %p45 = por %p43, %p44
      %p47 = scmp.ne.s32.totalorder %s30, %s46
      %p48 = scmp.eq.s32.totalorder %s22, 0
      %p49 = por %p47, %p48
      %s51 = sadd.s32 %s50, 1
      %p54 = scmp.eq.s32.totalorder %s16, 1
      %p55 = scmp.ne.s32.totalorder %s50, %s52
      %p56 = scmp.eq.s32.totalorder %s16, 0
      %p57 = por %p55, %p56
      %p58 = scmp.ne.s32.totalorder %s50, %s52
      %p59 = scmp.eq.s32.totalorder %s21, 1
      %p60 = por %p58, %p59
      %p61 = scmp.ne.s32.totalorder %s52, %s53
      %p62 = scmp.eq.s32.totalorder %s21, 0
      %p63 = por %p61, %p62
      %p64 = scmp.ne.s32.totalorder %s52, %s53
      %p65 = scmp.eq.s32.totalorder %s22, 1
      %p66 = por %p64, %p65
      %p68 = scmp.ne.s32.totalorder %s53, %s67
      %p69 = scmp.eq.s32.totalorder %s22, 0
      %p70 = por %p68, %p69
      %s72 = sadd.s32 %s71, 1
      %p75 = scmp.eq.s32.totalorder %s16, 1
      %p76 = scmp.ne.s32.totalorder %s71, %s73
      %p77 = scmp.eq.s32.totalorder %s16, 0
      %p78 = por %p76, %p77
      %p79 = scmp.ne.s32.totalorder %s71, %s73
      %p80 = scmp.eq.s32.totalorder %s21, 1
      %p81 = por %p79, %p80
      %p82 = scmp.ne.s32.totalorder %s73, %s74
      %p83 = scmp.eq.s32.totalorder %s21, 0
      %p84 = por %p82, %p83
      %p85 = scmp.ne.s32.totalorder %s73, %s74
      %p86 = scmp.eq.s32.totalorder %s22, 1
      %p87 = por %p85, %p86
      %p89 = scmp.ne.s32.totalorder %s74, %s88
      %p90 = scmp.eq.s32.totalorder %s22, 0
      %p91 = por %p89, %p90
      %s92 = ssub.s32 %s16, %s23
      %p93 = scmp.eq.s32.totalorder %s92, 0
      %s95 = sadd.s32 %s94, 1
      %s96 = scalar_select %p93, %s94, %s95
      %p99 = pneg %p93
      %p100 = scmp.eq.s32.totalorder %s16, 1
      %p101 = por %p99, %p100
      %p102 = scmp.ne.s32.totalorder %s94, %s97
      %p103 = scmp.eq.s32.totalorder %s16, 0
      %p104 = por %p102, %p103
      %p105 = scmp.ne.s32.totalorder %s94, %s97
      %p106 = scmp.eq.s32.totalorder %s21, 1
      %p107 = por %p105, %p106
      %p108 = scmp.ne.s32.totalorder %s97, %s98
      %p109 = scmp.eq.s32.totalorder %s21, 0
      %p110 = por %p108, %p109
      %p111 = scmp.ne.s32.totalorder %s97, %s98
      %p112 = scmp.eq.s32.totalorder %s22, 1
      %p113 = por %p111, %p112
      %p115 = scmp.ne.s32.totalorder %s98, %s114
      %p116 = scmp.eq.s32.totalorder %s22, 0
      %p117 = por %p115, %p116
      %p118 = scmp.le.s32.totalorder 1, %s16
      %p119 = scmp.lt.s32.totalorder %s16, 3
      %p120 = pnand %p118, %p119
      %p121 = pneg %p120
      // Predicated region
      $region9: #{tpu_custom_call.1} parent=5 // pred_check
        _
      $region10: #{tpu_custom_call.1} parent=5 // pred_check_branch
        %123 = sbr.rel (%p120) target = $region12
      $region11: #{tpu_custom_call.1} parent=5 // pred_region
        %s124 = ssub.s32 %s16, 1
        // Predicated region
        $region13: #{tpu_custom_call.1} parent=11 // pred_check
          %p125 = pneg %p63
        $region14: #{tpu_custom_call.1} parent=11 // pred_check_branch
          %127 = sbr.rel (%p125) target = $region16
        $region15: #{tpu_custom_call.1} parent=11 // pred_region
          %s129 = ssub.s32 128, 128
          %130 = vsyncadd [#allocation6], %s129
          %s132 = sshll.u32 [#allocation5], 4
          %s133 = int_to_ptr.vmem [resolvable:$true] %s132
          %135 = dma.hbm_to_vmem [thread:$0]  %s1, 128, %s133, [#allocation6]
        $region16: #{tpu_custom_call.1} parent=11 // pred_fallthru
          _
        // Predicated region
        $region17: #{tpu_custom_call.1} parent=11 // pred_check
          %p136 = pneg %p84
        $region18: #{tpu_custom_call.1} parent=11 // pred_check_branch
          %138 = sbr.rel (%p136) target = $region20
        $region19: #{tpu_custom_call.1} parent=11 // pred_region
          %s140 = ssub.s32 128, 128
          %141 = vsyncadd [#allocation6], %s140
          %s143 = sshll.u32 [#allocation7], 4
          %s144 = int_to_ptr.vmem [resolvable:$true] %s143
          %146 = dma.hbm_to_vmem [thread:$0]  %s2, 128, %s144, [#allocation6]
        $region20: #{tpu_custom_call.1} parent=11 // pred_fallthru
          _
      $region12: #{tpu_custom_call.1} parent=5 // pred_fallthru
        _
      %p147 = scmp.lt.s32.totalorder %s16, 2
      // Predicated region
      $region21: #{tpu_custom_call.1} parent=5 // pred_check
        %p148 = pneg %p147
      $region22: #{tpu_custom_call.1} parent=5 // pred_check_branch
        %150 = sbr.rel (%p148) target = $region24
      $region23: #{tpu_custom_call.1} parent=5 // pred_region
        // Predicated region
        $region25: #{tpu_custom_call.1} parent=23 // pred_check
          %p151 = pneg %p36
        $region26: #{tpu_custom_call.1} parent=23 // pred_check_branch
          %153 = sbr.rel (%p151) target = $region28
        $region27: #{tpu_custom_call.1} parent=23 // pred_region
          %s154 = sand.u32 %s26, 1
          %s155 = scalar_lea.sflag [#allocation3], %s154
          %s156 = sand.u32 %s26, 1
          %s157 = smul.addr %s156, 4
          %s158 = scalar_lea.vmem [#allocation2], %s157
          %s160 = ssub.s32 64, 64
          %161 = vsyncadd %s155, %s160
          %s162 = smul.addr %s16, 64
          %s163 = scalar_lea.hbm %s0, %s162
          %s165 = sshll.u32 %s158, 4
          %s166 = int_to_ptr.vmem [resolvable:$true] %s165
          %168 = dma.hbm_to_vmem [thread:$0]  %s163, 64, %s166, %s155
        $region28: #{tpu_custom_call.1} parent=23 // pred_fallthru
          _
      $region24: #{tpu_custom_call.1} parent=5 // pred_fallthru
        _
      %p169 = scmp.le.s32.totalorder 1, %s16
      %p170 = scmp.lt.s32.totalorder %s16, 3
      %p171 = pnand %p169, %p170
      %p172 = pneg %p171
      // Predicated region
      $region29: #{tpu_custom_call.1} parent=5 // pred_check
        _
      $region30: #{tpu_custom_call.1} parent=5 // pred_check_branch
        %174 = sbr.rel (%p171) target = $region32
      $region31: #{tpu_custom_call.1} parent=5 // pred_region
        %s175 = ssub.s32 %s16, 1
        %s176 = sand.u32 %s29, 1
        %s177 = scalar_lea.sflag [#allocation3], %s176
        %s178 = sand.u32 %s29, 1
        %s179 = smul.addr %s178, 4
        %s180 = scalar_lea.vmem [#allocation2], %s179
        // Predicated region
        $region33: #{tpu_custom_call.1} parent=31 // pred_check
          %p181 = pneg %p42
        $region34: #{tpu_custom_call.1} parent=31 // pred_check_branch
          %183 = sbr.rel (%p181) target = $region36
        $region35: #{tpu_custom_call.1} parent=31 // pred_region
          %184 = dma.done %s177, 64
        $region36: #{tpu_custom_call.1} parent=31 // pred_fallthru
          _
        // Predicated region
        $region37: #{tpu_custom_call.1} parent=31 // pred_check
          %p185 = pneg %p63
        $region38: #{tpu_custom_call.1} parent=31 // pred_check_branch
          %187 = sbr.rel (%p185) target = $region40
        $region39: #{tpu_custom_call.1} parent=31 // pred_region
          %188 = dma.done [#allocation6], 128
        $region40: #{tpu_custom_call.1} parent=31 // pred_fallthru
          _
        // Predicated region
        $region41: #{tpu_custom_call.1} parent=31 // pred_check
          %p189 = pneg %p84
        $region42: #{tpu_custom_call.1} parent=31 // pred_check_branch
          %191 = sbr.rel (%p189) target = $region44
        $region43: #{tpu_custom_call.1} parent=31 // pred_region
          %192 = dma.done [#allocation6], 128
        $region44: #{tpu_custom_call.1} parent=31 // pred_fallthru
          _
        %s193 = sand.u32 %s29, 1
        %s194 = scalar_lea.sflag [#allocation3], %s193
        %s195 = sand.u32 %s29, 1
        %s196 = smul.addr %s195, 4
        %s197 = scalar_lea.vmem [#allocation2], %s196
        %p198 = pneg %p42
        %p199 = pneg %p39
        %p200 = pneg %p63
        %p201 = pneg %p60
        %p202 = pneg %p84
        %p203 = pneg %p81
        %p204 = pneg %p110
        %p205 = pneg %p107
        %s206 = sand.u32 %s97, 1
        %s207 = scalar_lea.sflag [#allocation4], %s206
        %s208 = sand.u32 %s97, 1
        %s209 = scalar_lea.vmem [#allocation8], %s208
        %v210 = vld [vmem:[%s180] sm:$0x1]
        %v211 = vld [vmem:[%s180 + $0x1] sm:$0x1]
        %v212 = vld [vmem:[%s180 + $0x2] sm:$0x1]
        %v213 = vlaneseq
        %v214 = vshrl.u32 %v213, 7
        %v215 = vadd.s32 %v214, 8
        %v216 = vlaneseq
        %v217 = vshrl.u32 %v216, 7
        %v218 = vsub.s32 0, %v217
        %v219 = vrot.slane %v210, %v218
        %vm220 = vcmp.eq.s32.totalorder %v214, %v219
        %vm221 = vcmp.eq.s32.totalorder %v215, %v219
        %v222 = vsel %vm220, 1, 0
        %v223 = vsel %vm221, 1, 0
        %v224 = vcvt.s32.f32 %v222
        %v225 = vcvt.s32.f32 %v223
        %v226 = vld [vmem:[#allocation5] sm:$0xff]
        %vm227 = vcmask 130048
        %v229 = vsel %vm227, %v226, 0
        %231 = vmatprep.subr.mxu0 0.0
        %232 = vmatpush1.msra.mxu0 0.0
        %233 = vmatprep.subr.mxu0 0.0
        %234 = vmatpush1.msra.mxu0 0.0
        %235 = vmatprep.subr.mxu0 0.0
        %236 = vmatpush1.msra.mxu0 0.0
        %237 = vmatprep.subr.mxu0 0.0
        %238 = vmatpush1.msra.mxu0 0.0
        %239 = vmatprep.subr.mxu0 0.0
        %240 = vmatpush1.msra.mxu0 0.0
        %241 = vmatprep.subr.mxu0 0.0
        %242 = vmatpush1.msra.mxu0 0.0
        %243 = vmatprep.subr.mxu0 0.0
        %244 = vmatpush1.msra.mxu0 0.0
        %245 = vmatprep.subr.mxu0 0.0
        %246 = vmatpush1.msra.mxu0 0.0
        %247 = vmatprep.subr.mxu0 0.0
        %248 = vmatpush1.msra.mxu0 0.0
        %249 = vmatprep.subr.mxu0 0.0
        %250 = vmatpush1.msra.mxu0 0.0
        %251 = vmatprep.subr.mxu0 0.0
        %252 = vmatpush1.msra.mxu0 0.0
        %253 = vmatprep.subr.mxu0 0.0
        %254 = vmatpush1.msra.mxu0 0.0
        %255 = vmatprep.subr.mxu0 0.0
        %256 = vmatpush1.msra.mxu0 0.0
        %257 = vmatprep.subr.mxu0 0.0
        %258 = vmatpush1.msra.mxu0 0.0
        %259 = vmatprep.subr.mxu0 0.0
        %260 = vmatpush1.msra.mxu0 %v225
        %261 = vmatprep.subr.mxu0 0.0
        %262 = vmatpush1.msra.mxu0 %v224
        %263 = vmatprep.subr.mxu0 0.0
        %264 = vmatpush2.msra.mxu0 0.0
        %265 = vmatprep.subr.mxu0 0.0
        %266 = vmatpush2.msra.mxu0 0.0
        %267 = vmatprep.subr.mxu0 0.0
        %268 = vmatpush2.msra.mxu0 0.0
        %269 = vmatprep.subr.mxu0 0.0
        %270 = vmatpush2.msra.mxu0 0.0
        %271 = vmatprep.subr.mxu0 0.0
        %272 = vmatpush2.msra.mxu0 0.0
        %273 = vmatprep.subr.mxu0 0.0
        %274 = vmatpush2.msra.mxu0 0.0
        %275 = vmatprep.subr.mxu0 0.0
        %276 = vmatpush2.msra.mxu0 0.0
        %277 = vmatprep.subr.mxu0 0.0
        %278 = vmatpush2.msra.mxu0 0.0
        %279 = vmatprep.subr.mxu0 0.0
        %280 = vmatpush2.msra.mxu0 0.0
        %281 = vmatprep.subr.mxu0 0.0
        %282 = vmatpush2.msra.mxu0 0.0
        %283 = vmatprep.subr.mxu0 0.0
        %284 = vmatpush2.msra.mxu0 0.0
        %285 = vmatprep.subr.mxu0 0.0
        %286 = vmatpush2.msra.mxu0 0.0
        %287 = vmatprep.subr.mxu0 0.0
        %288 = vmatpush2.msra.mxu0 0.0
        %289 = vmatprep.subr.mxu0 0.0
        %290 = vmatpush2.msra.mxu0 0.0
        %291 = vmatprep.subr.mxu0 0.0
        %292 = vmatpush2.msra.mxu0 0.0
        %293 = vmatprep.subr.mxu0 0.0
        %294 = vmatpush2.msra.mxu0 0.0
        %295 = vmatprep.mubr.f32.mxu0 0.0
        %296 = vmatmul.mubr.f32.gmra.mxu0 %v229
        %v297 = vpop.f32.mrf.mxu0
        %v298 = vadd.f32 0.0, %v297
        %v299 = vpop.f32.mrf.mxu0
        %300 = vdwg.mxu0
        %v301 = vlaneseq
        %v302 = vshrl.u32 %v301, 7
        %v303 = vsub.s32 0, %v302
        %v304 = vrot.slane %v211, %v303
        %vm305 = vcmp.eq.s32.totalorder %v214, %v304
        %v306 = vsel %vm305, 1, 0
        %v307 = vcvt.s32.f32 %v306
        %v308 = vld [vmem:[#allocation7] sm:$0xff]
        %vm309 = vcmask 64512
        %v311 = vsel %vm309, %v308, 0
        %313 = vmatprep.subr.mxu0 0.0
        %314 = vmatpush1.msra.mxu0 0.0
        %315 = vmatprep.subr.mxu0 0.0
        %316 = vmatpush1.msra.mxu0 0.0
        %317 = vmatprep.subr.mxu0 0.0
        %318 = vmatpush1.msra.mxu0 0.0
        %319 = vmatprep.subr.mxu0 0.0
        %320 = vmatpush1.msra.mxu0 0.0
        %321 = vmatprep.subr.mxu0 0.0
        %322 = vmatpush1.msra.mxu0 0.0
        %323 = vmatprep.subr.mxu0 0.0
        %324 = vmatpush1.msra.mxu0 0.0
        %325 = vmatprep.subr.mxu0 0.0
        %326 = vmatpush1.msra.mxu0 0.0
        %327 = vmatprep.subr.mxu0 0.0
        %328 = vmatpush1.msra.mxu0 0.0
        %329 = vmatprep.subr.mxu0 0.0
        %330 = vmatpush1.msra.mxu0 0.0
        %331 = vmatprep.subr.mxu0 0.0
        %332 = vmatpush1.msra.mxu0 0.0
        %333 = vmatprep.subr.mxu0 0.0
        %334 = vmatpush1.msra.mxu0 0.0
        %335 = vmatprep.subr.mxu0 0.0
        %336 = vmatpush1.msra.mxu0 0.0
        %337 = vmatprep.subr.mxu0 0.0
        %338 = vmatpush1.msra.mxu0 0.0
        %339 = vmatprep.subr.mxu0 0.0
        %340 = vmatpush1.msra.mxu0 0.0
        %341 = vmatprep.subr.mxu0 0.0
        %342 = vmatpush1.msra.mxu0 0.0
        %343 = vmatprep.subr.mxu0 0.0
        %344 = vmatpush1.msra.mxu0 %v307
        %345 = vmatprep.subr.mxu0 0.0
        %346 = vmatpush2.msra.mxu0 0.0
        %347 = vmatprep.subr.mxu0 0.0
        %348 = vmatpush2.msra.mxu0 0.0
        %349 = vmatprep.subr.mxu0 0.0
        %350 = vmatpush2.msra.mxu0 0.0
        %351 = vmatprep.subr.mxu0 0.0
        %352 = vmatpush2.msra.mxu0 0.0
        %353 = vmatprep.subr.mxu0 0.0
        %354 = vmatpush2.msra.mxu0 0.0
        %355 = vmatprep.subr.mxu0 0.0
        %356 = vmatpush2.msra.mxu0 0.0
        %357 = vmatprep.subr.mxu0 0.0
        %358 = vmatpush2.msra.mxu0 0.0
        %359 = vmatprep.subr.mxu0 0.0
        %360 = vmatpush2.msra.mxu0 0.0
        %361 = vmatprep.subr.mxu0 0.0
        %362 = vmatpush2.msra.mxu0 0.0
        %363 = vmatprep.subr.mxu0 0.0
        %364 = vmatpush2.msra.mxu0 0.0
        %365 = vmatprep.subr.mxu0 0.0
        %366 = vmatpush2.msra.mxu0 0.0
        %367 = vmatprep.subr.mxu0 0.0
        %368 = vmatpush2.msra.mxu0 0.0
        %369 = vmatprep.subr.mxu0 0.0
        %370 = vmatpush2.msra.mxu0 0.0
        %371 = vmatprep.subr.mxu0 0.0
        %372 = vmatpush2.msra.mxu0 0.0
        %373 = vmatprep.subr.mxu0 0.0
        %374 = vmatpush2.msra.mxu0 0.0
        %375 = vmatprep.subr.mxu0 0.0
        %376 = vmatpush2.msra.mxu0 0.0
        %377 = vmatprep.mubr.f32.mxu0 0.0
        %378 = vmatmul.mubr.f32.gmra.mxu0 %v311
        %v379 = vpop.f32.mrf.mxu0
        %v380 = vadd.f32 0.0, %v379
        %v381 = vpop.f32.mrf.mxu0
        %382 = vdwg.mxu0
        %v383 = vsub.f32 %v298, %v380
        %v384 = vmul.f32 %v383, %v383
        %v386 = vrot.slane %v384, 1
        %v388 = vadd.f32 %v384, %v386
        %v389 = vrot.slane %v384, 2
        %v391 = vadd.f32 %v388, %v389
        %v392 = vrsqrt.pop %v391
        %v393 = vmul.f32 %v391, %v392
        %vm394 = vcmp.eq.f32.partialorder %v391, inf
        %v395 = vsel %vm394, %v391, %v393
        %vm396 = vcmp.eq.f32.partialorder %v391, 0.0
        %v397 = vand.u32 %v391, 2147483648
        %v398 = vsel %vm396, %v397, %v395
        %vm399 = vcmp.eq.s32.totalorder %v212, 0
        %v400 = vsel %vm399, 0.16666667, 0.28833333
        %v402 = vrot.slane %v380, 3
        %v404 = vrot.slane %v380, 4
        %v406 = vsel %vm399, %v402, %v404
        %v407 = vmul.f32 %v398, %v400
        %v409 = vrot.slane %v407, 5
        %v411 = vadd.f32 %v298, %v409
        %v413 = vrot.slane %v406, 5
        %v415 = vadd.f32 %v411, %v413
        %416 = vst [vmem:[%s209 - $0x3] sm:$0x8] %v415
        %s417 = sand.u32 %s97, 1
        %s418 = scalar_lea.sflag [#allocation4], %s417
        %s419 = sand.u32 %s97, 1
        %s420 = scalar_lea.vmem [#allocation8], %s419
        // Predicated region
        $region45: #{tpu_custom_call.1} parent=31 // pred_check
          %p421 = pneg %p107
        $region46: #{tpu_custom_call.1} parent=31 // pred_check_branch
          %423 = sbr.rel (%p421) target = $region48
        $region47: #{tpu_custom_call.1} parent=31 // pred_region
          %s425 = ssub.s32 16, 16
          %426 = vsyncadd %s418, %s425
          %s427 = smul.addr %s21, 16
          %s428 = scalar_lea.hbm %s3, %s427
          %s430 = sshll.u32 %s420, 4
          %s431 = int_to_ptr.vmem [resolvable:$true] %s430
          %433 = dma.vmem_to_hbm [thread:$0]  %s431, 16, %s428, %s418
        $region48: #{tpu_custom_call.1} parent=31 // pred_fallthru
          _
      $region32: #{tpu_custom_call.1} parent=5 // pred_fallthru
        _
      %p434 = scmp.le.s32.totalorder 2, %s16
      // Predicated region
      $region49: #{tpu_custom_call.1} parent=5 // pred_check
        %p435 = pneg %p434
      $region50: #{tpu_custom_call.1} parent=5 // pred_check_branch
        %437 = sbr.rel (%p435) target = $region52
      $region51: #{tpu_custom_call.1} parent=5 // pred_region
        %s438 = ssub.s32 %s16, 2
        // Predicated region
        $region53: #{tpu_custom_call.1} parent=51 // pred_check
          %p439 = pneg %p113
        $region54: #{tpu_custom_call.1} parent=51 // pred_check_branch
          %441 = sbr.rel (%p439) target = $region56
        $region55: #{tpu_custom_call.1} parent=51 // pred_region
          %s442 = sand.u32 %s98, 1
          %s443 = scalar_lea.sflag [#allocation4], %s442
          %s444 = sand.u32 %s98, 1
          %s445 = scalar_lea.vmem [#allocation8], %s444
          %446 = dma.done %s443, 16
        $region56: #{tpu_custom_call.1} parent=51 // pred_fallthru
          _
      $region52: #{tpu_custom_call.1} parent=5 // pred_fallthru
        _
    $region6: #{tpu_custom_call.1} parent=1 // loop_footer
      %s20 = sadd.s32 1, %s16
    $region7: #{tpu_custom_call.1} parent=1 // loop_footer_branch
      %15 = sbr.rel target = $region3
    $region8: #{tpu_custom_call.1} parent=1 // loop_exit
      _
    %447 = vsyncpa [#allocation3], 1
    %s448 = scalar_lea.sflag [#allocation3], 1
    %449 = vsyncpa %s448, 1
    %450 = vsyncpa [#allocation6], 1
    %451 = vsyncpa [#allocation4], 1
    %s452 = scalar_lea.sflag [#allocation4], 1
    %453 = vsyncpa %s452, 1

</llo_original>
